<compile_context>
chip_gen: v6e
topology: v6e:2x2x1
jax: 0.10.0
libtpu: 0.0.40
codegen_flags: <defaults>
</compile_context>

<pallas_src>
import functools
import math

import jax
import jax.numpy as jnp
from jax.experimental import pallas as pl
from jax.experimental.pallas import tpu as pltpu


def _sublane_multiple(dtype):
    """Minimum sublane multiple for packed dtypes (8 f32 / 16 bf16 / 32 i8)."""
    return max(8, 32 // jnp.dtype(dtype).itemsize)


def _pick_block(n, target, mult=8):
    """Largest multiple of `mult` dividing n and <= target; else n itself."""
    if n <= target:
        return n
    blk = (target // mult) * mult
    while blk >= mult:
        if n % blk == 0:
            return blk
        blk -= mult
    return n  # fall back to the whole axis (correct, just un-tiled)


# ---------------------------------------------------------------------------
# Kernel 1: fused QKV projection into a (3, B, T, d_out) buffer.
# ---------------------------------------------------------------------------
def _qkv_proj_kernel(x_ref, w_ref, o_ref):
    # x: (tm, d_in), w: (d_in, tn) -> one lane-dense (tm, tn) store.
    o_ref[0, 0] = jnp.dot(
        x_ref[0], w_ref[0], preferred_element_type=jnp.float32
    ).astype(o_ref.dtype)


def _qkv_projection(x, w3, *, block_m=256, block_n=512, out_dtype=None):
    b, t, d_in = x.shape
    d_out = w3.shape[-1]
    out_dtype = out_dtype if out_dtype is not None else x.dtype

    tm = _pick_block(t, block_m, _sublane_multiple(x.dtype))
    # Lane-dense weight/output tile; fall back to full d_out when it is not a
    # multiple of 128 (full-dim blocks always satisfy the (8,128) rule).
    tn = _pick_block(d_out, block_n, 128) if d_out % 128 == 0 else d_out

    # TODO(synk): for very large d_in add a K grid axis + f32 VMEM accumulator;
    # here each (d_in, tn) weight tile is assumed to fit comfortably in VMEM.
    return pl.pallas_call(
        _qkv_proj_kernel,
        out_shape=jax.ShapeDtypeStruct((3, b, t, d_out), out_dtype),
        grid_spec=pltpu.PrefetchScalarGridSpec(
            num_scalar_prefetch=0,
            grid=(b, t // tm, 3, d_out // tn),
            in_specs=[
                # x tile is constant across (oi, ni) -> stays VMEM-resident.
                pl.BlockSpec((1, tm, d_in), lambda bi, mi, oi, ni: (bi, mi, 0)),
                pl.BlockSpec((1, d_in, tn), lambda bi, mi, oi, ni: (oi, 0, ni)),
            ],
            out_specs=pl.BlockSpec((1, 1, tm, tn),
                                   lambda bi, mi, oi, ni: (oi, bi, mi, ni)),
        ),
        compiler_params=pltpu.CompilerParams(
            dimension_semantics=("parallel", "parallel", "parallel", "parallel"),
            vmem_limit_bytes=64 * 1024 * 1024),
    )(x, w3)


# ---------------------------------------------------------------------------
# Kernel 2: flash-style causal attention over a lower-triangular schedule.
# ---------------------------------------------------------------------------
def _flash_causal_kernel(qi_ref, ki_ref, q_ref, k_ref, v_ref, o_ref,
                         m_sc, l_sc, acc_sc, *, sm_scale, block_q, block_k):
    s_idx = pl.program_id(1)
    qi = qi_ref[s_idx]          # query-tile index for this schedule step
    ki = ki_ref[s_idx]          # key-tile index for this schedule step

    @pl.when(ki == 0)
    def _init():
        m_sc[...] = jnp.full_like(m_sc, -jnp.inf)
        l_sc[...] = jnp.zeros_like(l_sc)
        acc_sc[...] = jnp.zeros_like(acc_sc)

    q = q_ref[0, 0]
    k = k_ref[0, 0]
    v = v_ref[0, 0]

    def scores():
        # q @ k^T without materializing a transpose; scale folded into the
        # f32 scores (full precision, negligible cost).
        s = jax.lax.dot_general(q, k, (((1,), (1,)), ((), ())),
                                preferred_element_type=jnp.float32)
        return s * sm_scale

    def update(s):
        m_prev = m_sc[...]                                     # (tq, 1) f32
        m_new = jnp.maximum(m_prev, jnp.max(s, axis=-1, keepdims=True))
        alpha = jnp.exp(m_prev - m_new)
        p = jnp.exp(s - m_new)                                 # (tq, tk) f32
        l_sc[...] = alpha * l_sc[...] + jnp.sum(p, axis=-1, keepdims=True)
        acc_sc[...] = alpha * acc_sc[...] + jnp.dot(
            p.astype(v.dtype), v, preferred_element_type=jnp.float32)
        m_sc[...] = m_new

    # The schedule only contains tiles on or below the diagonal; masking is
    # needed only when the tile intersects the diagonal.
    on_diag = ki * block_k + (block_k - 1) > qi * block_q

    @pl.when(on_diag)
    def _masked():
        s = scores()
        row = qi * block_q + jax.lax.broadcasted_iota(jnp.int32, s.shape, 0)
        col = ki * block_k + jax.lax.broadcasted_iota(jnp.int32, s.shape, 1)
        # Large finite negative avoids NaN from exp(-inf - -inf).
        update(jnp.where(col > row, -1e30, s))

    @pl.when(jnp.logical_not(on_diag))
    def _unmasked():
        update(scores())

    last_k = (qi * block_q + (block_q - 1)) // block_k   # last key tile for qi

    @pl.when(ki == last_k)
    def _finalize():
        # TODO(synk): training-mode dropout on attention weights not
        # implemented (eval-mode / p == 0 identity).
        inv_l = pl.reciprocal(l_sc[...], approx=False)
        o_ref[0] = (acc_sc[...] * inv_l).astype(o_ref.dtype)


def causal_attention(x, w_query, w_key, w_value, *,
                     block_q=256, block_k=256, block_m=256, qkv_dtype=None):
    """x: (B, T, d_in); w_*: (d_in, d_out). Returns (B, T, d_out).

    qkv_dtype: optional dtype for the Q/K/V intermediate (e.g. jnp.bfloat16 to
    halve K/V streaming bytes); defaults to x.dtype for full precision.
    """
    b, t, d_in = x.shape
    d_out = w_query.shape[1]

    # Stacked weight (3, d_in, d_out). Under jit with constant weights this
    # folds to a constant; for repeated calls, pre-stack once and reuse.
    w3 = jnp.stack([w_query, w_key, w_value], axis=0)
    qkv = _qkv_projection(x, w3, block_m=block_m, out_dtype=qkv_dtype)

    smult = _sublane_multiple(qkv.dtype)
    tq = _pick_block(t, block_q, smult)
    tk = _pick_block(t, block_k, smult)
    sm_scale = 1.0 / math.sqrt(d_out)

    # Flattened lower-triangular (qi, ki) schedule (built once at trace time):
    # fully-masked key tiles are never DMA'd and never consume a grid step.
    n_q = t // tq
    qi_sched, ki_sched = [], []
    for qi in range(n_q):
        last = (qi * tq + tq - 1) // tk
        for ki in range(last + 1):
            qi_sched.append(qi)
            ki_sched.append(ki)
    qi_sched = jnp.asarray(qi_sched, dtype=jnp.int32)   # 1-D SMEM (no 2-D pad)
    ki_sched = jnp.asarray(ki_sched, dtype=jnp.int32)
    n_steps = int(len(qi_sched))

    kernel = functools.partial(_flash_causal_kernel, sm_scale=sm_scale,
                               block_q=tq, block_k=tk)

    return pl.pallas_call(
        kernel,
        out_shape=jax.ShapeDtypeStruct((b, t, d_out), x.dtype),
        grid_spec=pltpu.PrefetchScalarGridSpec(
            num_scalar_prefetch=2,
            grid=(b, n_steps),
            in_specs=[
                # q tile: resident across the key loop of each query tile.
                pl.BlockSpec((1, 1, tq, d_out),
                             lambda bi, s, qm, km: (0, bi, qm[s], 0)),
                pl.BlockSpec((1, 1, tk, d_out),
                             lambda bi, s, qm, km: (1, bi, km[s], 0)),
                pl.BlockSpec((1, 1, tk, d_out),
                             lambda bi, s, qm, km: (2, bi, km[s], 0)),
            ],
            out_specs=pl.BlockSpec((1, tq, d_out),
                                   lambda bi, s, qm, km: (bi, qm[s], 0)),
            scratch_shapes=[
                pltpu.VMEM((tq, 1), jnp.float32),      # running max m
                pltpu.VMEM((tq, 1), jnp.float32),      # running denom l
                pltpu.VMEM((tq, d_out), jnp.float32),  # output accumulator
            ],
        ),
        compiler_params=pltpu.CompilerParams(
            dimension_semantics=("parallel", "arbitrary"),
            vmem_limit_bytes=64 * 1024 * 1024),
    )(qi_sched, ki_sched, qkv, qkv, qkv)


def _reference(x, w_query, w_key, w_value):
    """Pure-JAX reference mirroring the PyTorch forward (eval mode)."""
    q = x @ w_query
    k = x @ w_key
    v = x @ w_value
    scores = jnp.einsum("btd,bsd->bts", q, k)
    t = x.shape[1]
    mask = jnp.triu(jnp.ones((t, t), dtype=bool), k=1)
    scores = jnp.where(mask[None, :, :], -jnp.inf, scores)
    w = jax.nn.softmax(scores / (k.shape[-1] ** 0.5), axis=-1)
    return w @ v


if __name__ == "__main__":
    # Small shapes consistent with the module: batch=2, seq=8, d_in=32, d_out=32.
    B, T, D_IN, D_OUT = 2, 8, 32, 32
    key = jax.random.PRNGKey(0)
    kx, kq, kk, kv = jax.random.split(key, 4)

    x = jax.random.normal(kx, (B, T, D_IN), dtype=jnp.float32)
    # nn.Linear-style uniform init, stored pre-transposed as (d_in, d_out).
    bound = 1.0 / (D_IN ** 0.5)
    w_query = jax.random.uniform(kq, (D_IN, D_OUT), jnp.float32, -bound, bound)
    w_key = jax.random.uniform(kk, (D_IN, D_OUT), jnp.float32, -bound, bound)
    w_value = jax.random.uniform(kv, (D_IN, D_OUT), jnp.float32, -bound, bound)

    out = causal_attention(x, w_query, w_key, w_value)
    out = jax.block_until_ready(out)

    ref = _reference(x, w_query, w_key, w_value)
    assert out.shape == (B, T, D_OUT)
    assert jnp.allclose(out, ref, atol=1e-3, rtol=1e-3), \
        float(jnp.max(jnp.abs(out - ref)))

    print("KERNEL_OK")
</pallas_src>

<mosaic_0001>
module attributes {stable_mosaic.version = 11 : i64} {
  func.func @_qkv_proj_kernel(%arg0: i32, %arg1: i32, %arg2: i32, %arg3: i32, %arg4: memref<1x8x32xf32, #tpu.memory_space<vmem>>, %arg5: memref<1x32x32xf32, #tpu.memory_space<vmem>>, %arg6: memref<1x1x8x32xf32, #tpu.memory_space<vmem>>) attributes {dimension_semantics = [#tpu.dimension_semantics<parallel>, #tpu.dimension_semantics<parallel>, #tpu.dimension_semantics<parallel>, #tpu.dimension_semantics<parallel>], iteration_bounds = array<i64: 2, 1, 3, 1>, scalar_prefetch = 0 : i64, scratch_operands = 0 : i64, tpu.core_type = #tpu.core_type<tc>, window_params = [{transform_indices = @transform_0, window_bounds = array<i64: 1, 8, 32>}, {transform_indices = @transform_1, window_bounds = array<i64: 1, 32, 32>}, {transform_indices = @transform_2, window_bounds = array<i64: 1, 1, 8, 32>}]} {
    %c0 = arith.constant 0 : index
    %c0_0 = arith.constant 0 : index
    %c0_1 = arith.constant 0 : index
    %0 = vector.load %arg4[%c0, %c0_0, %c0_1] : memref<1x8x32xf32, #tpu.memory_space<vmem>>, vector<1x8x32xf32>
    %1 = vector.shape_cast %0 : vector<1x8x32xf32> to vector<8x32xf32>
    %c0_2 = arith.constant 0 : index
    %c0_3 = arith.constant 0 : index
    %c0_4 = arith.constant 0 : index
    %2 = vector.load %arg5[%c0_2, %c0_3, %c0_4] : memref<1x32x32xf32, #tpu.memory_space<vmem>>, vector<1x32x32xf32>
    %3 = vector.shape_cast %2 : vector<1x32x32xf32> to vector<32x32xf32>
    %cst = arith.constant dense<0.000000e+00> : vector<8x32xf32>
    %4 = tpu.matmul %1, %3, %cst {dimension_numbers = #tpu.dot_dimension_numbers<[1], [0], [0], [1], [0, 0, 1, 1], [], []>} : vector<8x32xf32>, vector<32x32xf32>, vector<8x32xf32> -> vector<8x32xf32>
    %c0_5 = arith.constant 0 : index
    %c0_6 = arith.constant 0 : index
    %c0_7 = arith.constant 0 : index
    %c0_8 = arith.constant 0 : index
    %5 = vector.load %arg6[%c0_5, %c0_6, %c0_7, %c0_8] : memref<1x1x8x32xf32, #tpu.memory_space<vmem>>, vector<1x1x8x32xf32>
    %6 = vector.shape_cast %5 : vector<1x1x8x32xf32> to vector<8x32xf32>
    %7 = vector.shape_cast %4 : vector<8x32xf32> to vector<1x1x8x32xf32>
    tpu.vector_store %arg6[%c0_5, %c0_6, %c0_7, %c0_8], %7 {strides = array<i32>} : memref<1x1x8x32xf32, #tpu.memory_space<vmem>>, vector<1x1x8x32xf32>,
    return
  }
  func.func @transform_0(%arg0: i32, %arg1: i32, %arg2: i32, %arg3: i32) -> (i32, i32, i32) {
    %c0_i32 = arith.constant 0 : i32
    %c0_i32_0 = arith.constant 0 : i32
    return %arg0, %arg1, %c0_i32 : i32, i32, i32
  }
  func.func @transform_1(%arg0: i32, %arg1: i32, %arg2: i32, %arg3: i32) -> (i32, i32, i32) {
    %c0_i32 = arith.constant 0 : i32
    %c0_i32_0 = arith.constant 0 : i32
    return %arg2, %c0_i32, %arg3 : i32, i32, i32
  }
  func.func @transform_2(%arg0: i32, %arg1: i32, %arg2: i32, %arg3: i32) -> (i32, i32, i32, i32) {
    %c0_i32 = arith.constant 0 : i32
    return %arg2, %arg0, %arg1, %arg3 : i32, i32, i32, i32
  }
}

</mosaic_0001>

<llo_original>
// kernel: tpu_custom_call.1
$region0: #{tpu_custom_call.1}
  #allocation0 [shape = 'u32[]', space=smem, size = 0x4, offset = 0x4, fixed_abs, tag = 'smem constant byte address 0x4 - core index']
  #allocation1 [shape = 'u32[144,128]{1,0:T(1,128)}', space=vmem, size = 0x12000, scoped, tag = 'internal scratch']
  %s0 = inlined_call_operand.hbm [shape: f32[2,8,32], index: 0, kind: input, shape index: {}]
  %s1 = inlined_call_operand.hbm [shape: f32[3,32,32], index: 1, kind: input, shape index: {}]
  %s2 = inlined_call_operand.hbm [shape: f32[3,2,8,32], index: 2, kind: output, shape index: {}]
  %s3 = sld [smem:[#allocation0]]
  $region49: #{tpu_custom_call.1} parent=0
    _
  %s5 = ssub.s32 1, %s3
  %s6 = scalar_select 0, %s5, %s3
  $region1: #{tpu_custom_call.1} parent=0
    #allocation2 [shape = 'u8[8192]{0}', space=vmem, size = 0x2000, scoped, tag = 'input window, operand 0']
    #allocation3 [shape = 's32[2]{0}', space=sflag, size = 0x8, scoped, tag = 'scoped memory for tpu_custom_call.1']
    #allocation4 [shape = 's32[2]{0}', space=sflag, size = 0x8, scoped, tag = 'scoped memory for tpu_custom_call.1']
    #allocation5 [shape = 'u8[32768]{0}', space=vmem, size = 0x8000, scoped, tag = 'input window, operand 1']
    #allocation6 [shape = 's32[2]{0}', space=sflag, size = 0x8, scoped, tag = 'scoped memory for tpu_custom_call.1']
    #allocation7 [shape = 'u8[8192]{0}', space=vmem, size = 0x2000, scoped, tag = 'output window, operand 0']
    %7 = vsyncpa [#allocation3], 0
    %s8 = scalar_lea.sflag [#allocation3], 1
    %9 = vsyncpa %s8, 0
    %10 = vsyncpa [#allocation6], 0
    %s11 = scalar_lea.sflag [#allocation6], 1
    %12 = vsyncpa %s11, 0
    %13 = vsyncpa [#allocation4], 0
    %s14 = scalar_lea.sflag [#allocation4], 1
    %15 = vsyncpa %s14, 0
    loop: start=0, step=1, limit=8
    $region2: #{tpu_custom_call.1} parent=1 // loop_pre_header
      _
    $region3: #{tpu_custom_call.1} parent=1 // loop_header
      %s17 = sphi 0, %s21
      %p18 = scmp.ge.s32.totalorder %s17, 8
      %s24 = sphi 0, %s50
      %s25 = sphi 0, %s46
      %s26 = sphi 0, %s42
      %s27 = sphi 0, %s38
      %s28 = sphi 0, %s24
      %s29 = sphi 0, %s25
      %s30 = sphi 0, %s26
      %s31 = sphi 0, %s27
      %s32 = sphi 0, %s28
      %s33 = sphi 0, %s29
      %s34 = sphi 0, %s30
      %s35 = sphi 0, %s31
      %s55 = sphi 0, %s57
      %s58 = sphi 0, %s55
      %s59 = sphi 0, %s58
      %s75 = sphi 0, %s59
      %s83 = sphi 0, %s85
      %s86 = sphi 0, %s83
      %s87 = sphi 0, %s86
      %s103 = sphi 0, %s87
      %s115 = sphi 0, %s117
      %s118 = sphi 0, %s115
      %s119 = sphi 0, %s118
      %s135 = sphi 0, %s119
    $region4: #{tpu_custom_call.1} parent=1 // loop_header_branch
      %20 = sbr.rel (%p18) target = $region8
    $region5: #{tpu_custom_call.1} parent=1 // loop_body
      %s22 = ssub.s32 %s17, 1
      %s23 = ssub.s32 %s17, 2
      %s36 = sadd.s32 1, %s27
      %p37 = scmp.ge.s32.totalorder %s36, 1
      %s38 = scalar_select %p37, 0, %s36
      %s39 = sadd.s32 1, %s26
      %s40 = scalar_select %p37, %s39, %s26
      %p41 = scmp.ge.s32.totalorder %s40, 3
      %s42 = scalar_select %p41, 0, %s40
      %s43 = sadd.s32 1, %s25
      %s44 = scalar_select %p41, %s43, %s25
      %p45 = scmp.ge.s32.totalorder %s44, 1
      %s46 = scalar_select %p45, 0, %s44
      %s47 = sadd.s32 1, %s24
      %s48 = scalar_select %p45, %s47, %s24
      %p49 = scmp.ge.s32.totalorder %s48, 2
      %s50 = scalar_select %p49, 0, %s48
      %s51 = ssub.s32 %s24, %s50
      %s52 = ssub.s32 %s25, %s46
      %s53 = sor.u32 %s51, %s52
      %p54 = scmp.eq.s32.totalorder %s53, 0
      %s56 = sadd.s32 %s55, 1
      %s57 = scalar_select %p54, %s55, %s56
      %p60 = pneg %p54
      %p61 = scmp.eq.s32.totalorder %s17, 5
      %p62 = por %p60, %p61
      %p63 = scmp.ne.s32.totalorder %s55, %s58
      %p64 = scmp.eq.s32.totalorder %s17, 0
      %p65 = por %p63, %p64
      %p66 = scmp.ne.s32.totalorder %s55, %s58
      %p67 = scmp.eq.s32.totalorder %s22, 5
      %p68 = por %p66, %p67
      %p69 = scmp.ne.s32.totalorder %s58, %s59
      %p70 = scmp.eq.s32.totalorder %s22, 0
      %p71 = por %p69, %p70
      %p72 = scmp.ne.s32.totalorder %s58, %s59
      %p73 = scmp.eq.s32.totalorder %s23, 5
      %p74 = por %p72, %p73
      %p76 = scmp.ne.s32.totalorder %s59, %s75
      %p77 = scmp.eq.s32.totalorder %s23, 0
      %p78 = por %p76, %p77
      %s79 = ssub.s32 %s26, %s42
      %s80 = ssub.s32 %s27, %s38
      %s81 = sor.u32 %s79, %s80
      %p82 = scmp.eq.s32.totalorder %s81, 0
      %s84 = sadd.s32 %s83, 1
      %s85 = scalar_select %p82, %s83, %s84
      %p88 = pneg %p82
      %p89 = scmp.eq.s32.totalorder %s17, 5
      %p90 = por %p88, %p89
      %p91 = scmp.ne.s32.totalorder %s83, %s86
      %p92 = scmp.eq.s32.totalorder %s17, 0
      %p93 = por %p91, %p92
      %p94 = scmp.ne.s32.totalorder %s83, %s86
      %p95 = scmp.eq.s32.totalorder %s22, 5
      %p96 = por %p94, %p95
      %p97 = scmp.ne.s32.totalorder %s86, %s87
      %p98 = scmp.eq.s32.totalorder %s22, 0
      %p99 = por %p97, %p98
      %p100 = scmp.ne.s32.totalorder %s86, %s87
      %p101 = scmp.eq.s32.totalorder %s23, 5
      %p102 = por %p100, %p101
      %p104 = scmp.ne.s32.totalorder %s87, %s103
      %p105 = scmp.eq.s32.totalorder %s23, 0
      %p106 = por %p104, %p105
      %s107 = ssub.s32 %s26, %s42
      %s108 = ssub.s32 %s24, %s50
      %s109 = sor.u32 %s107, %s108
      %s110 = ssub.s32 %s25, %s46
      %s111 = sor.u32 %s109, %s110
      %s112 = ssub.s32 %s27, %s38
      %s113 = sor.u32 %s111, %s112
      %p114 = scmp.eq.s32.totalorder %s113, 0
      %s116 = sadd.s32 %s115, 1
      %s117 = scalar_select %p114, %s115, %s116
      %p120 = pneg %p114
      %p121 = scmp.eq.s32.totalorder %s17, 5
      %p122 = por %p120, %p121
      %p123 = scmp.ne.s32.totalorder %s115, %s118
      %p124 = scmp.eq.s32.totalorder %s17, 0
      %p125 = por %p123, %p124
      %p126 = scmp.ne.s32.totalorder %s115, %s118
      %p127 = scmp.eq.s32.totalorder %s22, 5
      %p128 = por %p126, %p127
      %p129 = scmp.ne.s32.totalorder %s118, %s119
      %p130 = scmp.eq.s32.totalorder %s22, 0
      %p131 = por %p129, %p130
      %p132 = scmp.ne.s32.totalorder %s118, %s119
      %p133 = scmp.eq.s32.totalorder %s23, 5
      %p134 = por %p132, %p133
      %p136 = scmp.ne.s32.totalorder %s119, %s135
      %p137 = scmp.eq.s32.totalorder %s23, 0
      %p138 = por %p136, %p137
      %p139 = scmp.le.s32.totalorder 1, %s17
      %p140 = scmp.lt.s32.totalorder %s17, 7
      %p141 = pnand %p139, %p140
      %p142 = pneg %p141
      // Predicated region
      $region9: #{tpu_custom_call.1} parent=5 // pred_check
        _
      $region10: #{tpu_custom_call.1} parent=5 // pred_check_branch
        %144 = sbr.rel (%p141) target = $region12
      $region11: #{tpu_custom_call.1} parent=5 // pred_region
        %s145 = ssub.s32 %s17, 1
      $region12: #{tpu_custom_call.1} parent=5 // pred_fallthru
        _
      %p146 = scmp.lt.s32.totalorder %s17, 6
      // Predicated region
      $region13: #{tpu_custom_call.1} parent=5 // pred_check
        %p147 = pneg %p146
      $region14: #{tpu_custom_call.1} parent=5 // pred_check_branch
        %149 = sbr.rel (%p147) target = $region16
      $region15: #{tpu_custom_call.1} parent=5 // pred_region
        // Predicated region
        $region17: #{tpu_custom_call.1} parent=15 // pred_check
          %p150 = pneg %p65
        $region18: #{tpu_custom_call.1} parent=15 // pred_check_branch
          %152 = sbr.rel (%p150) target = $region20
        $region19: #{tpu_custom_call.1} parent=15 // pred_region
          %s153 = sand.u32 %s55, 1
          %s154 = scalar_lea.sflag [#allocation3], %s153
          %s155 = sand.u32 %s55, 1
          %s156 = smul.addr %s155, 8
          %s157 = scalar_lea.vmem [#allocation2], %s156
          %s159 = ssub.s32 128, 128
          %160 = vsyncadd %s154, %s159
          %s161 = sadd.s32 %s25, %s24
          %s162 = smul.addr %s161, 128
          %s163 = scalar_lea.hbm %s0, %s162
          %s165 = sshll.u32 %s157, 4
          %s166 = int_to_ptr.vmem [resolvable:$true] %s165
          %168 = dma.hbm_to_vmem [thread:$0]  %s163, 128, %s166, %s154
        $region20: #{tpu_custom_call.1} parent=15 // pred_fallthru
          _
        // Predicated region
        $region21: #{tpu_custom_call.1} parent=15 // pred_check
          %p169 = pneg %p93
        $region22: #{tpu_custom_call.1} parent=15 // pred_check_branch
          %171 = sbr.rel (%p169) target = $region24
        $region23: #{tpu_custom_call.1} parent=15 // pred_region
          %s172 = sand.u32 %s83, 1
          %s173 = scalar_lea.sflag [#allocation6], %s172
          %s174 = sand.u32 %s83, 1
          %s175 = smul.addr %s174, 32
          %s176 = scalar_lea.vmem [#allocation5], %s175
          %s178 = ssub.s32 512, 512
          %179 = vsyncadd %s173, %s178
          %s180 = smul.addr %s26, 4
          %s181 = sadd.s32 %s27, %s180
          %s182 = smul.addr %s181, 128
          %s183 = scalar_lea.hbm %s1, %s182
          %s184 = sshll.u32 %s176, 4
          %s185 = int_to_ptr.vmem [resolvable:$true] %s184
          %190 = dma.hbm_to_vmem [thread:$0]  %s183, 512, %s185, %s173, 128, 128, 8
        $region24: #{tpu_custom_call.1} parent=15 // pred_fallthru
          _
      $region16: #{tpu_custom_call.1} parent=5 // pred_fallthru
        _
      %p191 = scmp.le.s32.totalorder 1, %s17
      %p192 = scmp.lt.s32.totalorder %s17, 7
      %p193 = pnand %p191, %p192
      %p194 = pneg %p193
      // Predicated region
      $region25: #{tpu_custom_call.1} parent=5 // pred_check
        _
      $region26: #{tpu_custom_call.1} parent=5 // pred_check_branch
        %196 = sbr.rel (%p193) target = $region28
      $region27: #{tpu_custom_call.1} parent=5 // pred_region
        %s197 = ssub.s32 %s17, 1
        %s198 = sand.u32 %s58, 1
        %s199 = scalar_lea.sflag [#allocation3], %s198
        %s200 = sand.u32 %s58, 1
        %s201 = smul.addr %s200, 8
        %s202 = scalar_lea.vmem [#allocation2], %s201
        // Predicated region
        $region29: #{tpu_custom_call.1} parent=27 // pred_check
          %p203 = pneg %p71
        $region30: #{tpu_custom_call.1} parent=27 // pred_check_branch
          %205 = sbr.rel (%p203) target = $region32
        $region31: #{tpu_custom_call.1} parent=27 // pred_region
          %206 = dma.done %s199, 128
        $region32: #{tpu_custom_call.1} parent=27 // pred_fallthru
          _
        %s207 = sand.u32 %s86, 1
        %s208 = scalar_lea.sflag [#allocation6], %s207
        %s209 = sand.u32 %s86, 1
        %s210 = smul.addr %s209, 32
        %s211 = scalar_lea.vmem [#allocation5], %s210
        // Predicated region
        $region33: #{tpu_custom_call.1} parent=27 // pred_check
          %p212 = pneg %p99
        $region34: #{tpu_custom_call.1} parent=27 // pred_check_branch
          %214 = sbr.rel (%p212) target = $region36
        $region35: #{tpu_custom_call.1} parent=27 // pred_region
          %215 = dma.done %s208, 512
        $region36: #{tpu_custom_call.1} parent=27 // pred_fallthru
          _
        %s216 = sand.u32 %s58, 1
        %s217 = scalar_lea.sflag [#allocation3], %s216
        %s218 = sand.u32 %s58, 1
        %s219 = smul.addr %s218, 8
        %s220 = scalar_lea.vmem [#allocation2], %s219
        %p221 = pneg %p71
        %p222 = pneg %p68
        %s223 = sand.u32 %s86, 1
        %s224 = scalar_lea.sflag [#allocation6], %s223
        %s225 = sand.u32 %s86, 1
        %s226 = smul.addr %s225, 32
        %s227 = scalar_lea.vmem [#allocation5], %s226
        %p228 = pneg %p99
        %p229 = pneg %p96
        %p230 = pneg %p131
        %p231 = pneg %p128
        %s232 = sand.u32 %s118, 1
        %s233 = scalar_lea.sflag [#allocation4], %s232
        %s234 = sand.u32 %s118, 1
        %s235 = smul.addr %s234, 8
        %s236 = scalar_lea.vmem [#allocation7], %s235
        %v237 = vld [vmem:[%s202] sm:$0xff]
        %v238 = vld [vmem:[%s211] sm:$0xff]
        %v239 = vld [vmem:[%s211 + $0x8] sm:$0xff]
        %v240 = vld [vmem:[%s211 + $0x10] sm:$0xff]
        %v241 = vld [vmem:[%s211 + $0x18] sm:$0xff]
        %vm242 = vcmask 261120
        %v244 = vsel %vm242, %v237, 0
        %246 = vmatprep.subr.mxu0 0.0
        %247 = vmatpush1.msra.mxu0 0.0
        %248 = vmatprep.subr.mxu0 0.0
        %249 = vmatpush1.msra.mxu0 0.0
        %250 = vmatprep.subr.mxu0 0.0
        %251 = vmatpush1.msra.mxu0 0.0
        %252 = vmatprep.subr.mxu0 0.0
        %253 = vmatpush1.msra.mxu0 0.0
        %254 = vmatprep.subr.mxu0 0.0
        %255 = vmatpush1.msra.mxu0 0.0
        %256 = vmatprep.subr.mxu0 0.0
        %257 = vmatpush1.msra.mxu0 0.0
        %258 = vmatprep.subr.mxu0 0.0
        %259 = vmatpush1.msra.mxu0 0.0
        %260 = vmatprep.subr.mxu0 0.0
        %261 = vmatpush1.msra.mxu0 0.0
        %262 = vmatprep.subr.mxu0 0.0
        %263 = vmatpush1.msra.mxu0 0.0
        %264 = vmatprep.subr.mxu0 0.0
        %265 = vmatpush1.msra.mxu0 0.0
        %266 = vmatprep.subr.mxu0 0.0
        %267 = vmatpush1.msra.mxu0 0.0
        %268 = vmatprep.subr.mxu0 0.0
        %269 = vmatpush1.msra.mxu0 0.0
        %270 = vmatprep.subr.mxu0 0.0
        %271 = vmatpush1.msra.mxu0 %v241
        %272 = vmatprep.subr.mxu0 0.0
        %273 = vmatpush1.msra.mxu0 %v240
        %274 = vmatprep.subr.mxu0 0.0
        %275 = vmatpush1.msra.mxu0 %v239
        %276 = vmatprep.subr.mxu0 0.0
        %277 = vmatpush1.msra.mxu0 %v238
        %278 = vmatprep.subr.mxu0 0.0
        %279 = vmatpush2.msra.mxu0 0.0
        %280 = vmatprep.subr.mxu0 0.0
        %281 = vmatpush2.msra.mxu0 0.0
        %282 = vmatprep.subr.mxu0 0.0
        %283 = vmatpush2.msra.mxu0 0.0
        %284 = vmatprep.subr.mxu0 0.0
        %285 = vmatpush2.msra.mxu0 0.0
        %286 = vmatprep.subr.mxu0 0.0
        %287 = vmatpush2.msra.mxu0 0.0
        %288 = vmatprep.subr.mxu0 0.0
        %289 = vmatpush2.msra.mxu0 0.0
        %290 = vmatprep.subr.mxu0 0.0
        %291 = vmatpush2.msra.mxu0 0.0
        %292 = vmatprep.subr.mxu0 0.0
        %293 = vmatpush2.msra.mxu0 0.0
        %294 = vmatprep.subr.mxu0 0.0
        %295 = vmatpush2.msra.mxu0 0.0
        %296 = vmatprep.subr.mxu0 0.0
        %297 = vmatpush2.msra.mxu0 0.0
        %298 = vmatprep.subr.mxu0 0.0
        %299 = vmatpush2.msra.mxu0 0.0
        %300 = vmatprep.subr.mxu0 0.0
        %301 = vmatpush2.msra.mxu0 0.0
        %302 = vmatprep.subr.mxu0 0.0
        %303 = vmatpush2.msra.mxu0 0.0
        %304 = vmatprep.subr.mxu0 0.0
        %305 = vmatpush2.msra.mxu0 0.0
        %306 = vmatprep.subr.mxu0 0.0
        %307 = vmatpush2.msra.mxu0 0.0
        %308 = vmatprep.subr.mxu0 0.0
        %309 = vmatpush2.msra.mxu0 0.0
        %310 = vmatprep.mubr.f32.mxu0 0.0
        %311 = vmatmul.mubr.f32.gmra.mxu0 %v244
        %v312 = vpop.f32.mrf.mxu0
        %v313 = vadd.f32 0.0, %v312
        %v314 = vpop.f32.mrf.mxu0
        %315 = vdwg.mxu0
        %316 = vst.msk [vmem:[%s236] sm:$0xff] %vm242, %v313
        %s317 = sand.u32 %s118, 1
        %s318 = scalar_lea.sflag [#allocation4], %s317
        %s319 = sand.u32 %s118, 1
        %s320 = smul.addr %s319, 8
        %s321 = scalar_lea.vmem [#allocation7], %s320
        // Predicated region
        $region37: #{tpu_custom_call.1} parent=27 // pred_check
          %p322 = pneg %p128
        $region38: #{tpu_custom_call.1} parent=27 // pred_check_branch
          %324 = sbr.rel (%p322) target = $region40
        $region39: #{tpu_custom_call.1} parent=27 // pred_region
          %s326 = ssub.s32 128, 128
          %327 = vsyncadd %s318, %s326
          %s328 = sadd.s32 %s31, %s29
          %s329 = sadd.s32 %s328, %s28
          %s330 = smul.addr %s30, 2
          %s331 = sadd.s32 %s329, %s330
          %s332 = smul.addr %s331, 128
          %s333 = scalar_lea.hbm %s2, %s332
          %s335 = sshll.u32 %s321, 4
          %s336 = int_to_ptr.vmem [resolvable:$true] %s335
          %338 = dma.vmem_to_hbm [thread:$0]  %s336, 128, %s333, %s318
        $region40: #{tpu_custom_call.1} parent=27 // pred_fallthru
          _
      $region28: #{tpu_custom_call.1} parent=5 // pred_fallthru
        _
      %p339 = scmp.le.s32.totalorder 2, %s17
      // Predicated region
      $region41: #{tpu_custom_call.1} parent=5 // pred_check
        %p340 = pneg %p339
      $region42: #{tpu_custom_call.1} parent=5 // pred_check_branch
        %342 = sbr.rel (%p340) target = $region44
      $region43: #{tpu_custom_call.1} parent=5 // pred_region
        %s343 = ssub.s32 %s17, 2
        // Predicated region
        $region45: #{tpu_custom_call.1} parent=43 // pred_check
          %p344 = pneg %p134
        $region46: #{tpu_custom_call.1} parent=43 // pred_check_branch
          %346 = sbr.rel (%p344) target = $region48
        $region47: #{tpu_custom_call.1} parent=43 // pred_region
          %s347 = sand.u32 %s119, 1
          %s348 = scalar_lea.sflag [#allocation4], %s347
          %s349 = sand.u32 %s119, 1
          %s350 = smul.addr %s349, 8
          %s351 = scalar_lea.vmem [#allocation7], %s350
          %352 = dma.done %s348, 128
        $region48: #{tpu_custom_call.1} parent=43 // pred_fallthru
          _
      $region44: #{tpu_custom_call.1} parent=5 // pred_fallthru
        _
    $region6: #{tpu_custom_call.1} parent=1 // loop_footer
      %s21 = sadd.s32 1, %s17
    $region7: #{tpu_custom_call.1} parent=1 // loop_footer_branch
      %16 = sbr.rel target = $region3
    $region8: #{tpu_custom_call.1} parent=1 // loop_exit
      _
    %353 = vsyncpa [#allocation3], 1
    %s354 = scalar_lea.sflag [#allocation3], 1
    %355 = vsyncpa %s354, 1
    %356 = vsyncpa [#allocation6], 1
    %s357 = scalar_lea.sflag [#allocation6], 1
    %358 = vsyncpa %s357, 1
    %359 = vsyncpa [#allocation4], 1
    %s360 = scalar_lea.sflag [#allocation4], 1
    %361 = vsyncpa %s360, 1

</llo_original>
